<compile_context>
chip_gen: v6e
topology: v6e:2x2x1
jax: 0.10.0
libtpu: 0.0.40
codegen_flags: <defaults>
</compile_context>

<pallas_src>
import numpy as np
import jax
import jax.numpy as jnp
from jax.experimental import pallas as pl
from jax.experimental.pallas import tpu as pltpu


def _bilinear_matrix(out_size: int, in_size: int) -> np.ndarray:
    """Interpolation matrix matching F.interpolate(mode='bilinear',
    align_corners=False): half-pixel centers, src clamped to >= 0."""
    A = np.zeros((out_size, in_size), dtype=np.float32)
    scale = in_size / out_size
    for j in range(out_size):
        src = max((j + 0.5) * scale - 0.5, 0.0)
        i0 = int(np.floor(src))
        i1 = min(i0 + 1, in_size - 1)
        w1 = src - i0
        A[j, i0] += 1.0 - w1
        A[j, i1] += w1
    return A


def _conv_bn_kernel(x_ref, w_ref, b_ref, o_ref):
    # x_ref: (Cin, H*W)   one batch element, spatially flattened (lane-dense)
    # w_ref: (Cout, Cin)  1x1 conv weight with BN scale folded in
    # b_ref: (Cout, 1)    folded BN bias
    # o_ref: (Cout, H*W)
    y = jnp.dot(w_ref[...], x_ref[...], preferred_element_type=jnp.float32)
    o_ref[...] = y + b_ref[...]


def _bilinear_resize_kernel(y_ref, awt_ref, ah_ref, o_ref):
    # y_ref:   (Bc, H, W)    block of N*Cout channel maps
    # awt_ref: (W, Wo)       A_w^T   (width resize)
    # ah_ref:  (Ho, H)       A_h     (height resize)
    # o_ref:   (Bc, Ho, Wo)  spatial (Wo) stays on the lane dimension
    bc, h, w = y_ref.shape
    ho, wo = ah_ref.shape[0], awt_ref.shape[1]
    y = y_ref[...]
    awt = jnp.broadcast_to(awt_ref[...], (bc, w, wo))
    t = jnp.einsum('bhw,bwv->bhv', y, awt,
                   preferred_element_type=jnp.float32)           # (Bc, H, Wo)
    ah = jnp.broadcast_to(ah_ref[...], (bc, ho, h))
    o_ref[...] = jnp.einsum('boh,bhv->bov', ah, t,
                            preferred_element_type=jnp.float32)  # (Bc, Ho, Wo)


def compression_forward(xs, conv_w, gamma, beta, run_mean, run_var,
                        scale_factor, eps=1e-5):
    """xs = [x0, x1, x2]; returns [resize(BN(conv1x1(x0))), x1, x2]."""
    x0, x1, x2 = xs
    N, Cin, H, W = x0.shape
    Cout = conv_w.shape[0]
    Ho, Wo = H * scale_factor, W * scale_factor
    HW = H * W

    # Fold eval-mode BatchNorm into the 1x1 conv (scale) + per-channel bias.
    # TODO(synk): a freshly constructed PyTorch module is in training mode
    # (batch-stat BN); we implement the standard eval-mode (running-stat) BN.
    inv_std = 1.0 / jnp.sqrt(run_var + eps)
    s = gamma * inv_std
    w_folded = (conv_w.reshape(Cout, Cin) * s[:, None]).astype(jnp.float32)
    bias = (beta - run_mean * s).reshape(Cout, 1).astype(jnp.float32)

    # Tiny separable interpolation matrices (no kron / dense resize matrix).
    A_h = jnp.asarray(_bilinear_matrix(Ho, H))        # (Ho, H)
    A_wT = jnp.asarray(_bilinear_matrix(Wo, W).T)     # (W, Wo)

    # ---- Stage 1: 1x1 conv + folded BN (lane-dense over H*W) -------------
    x_flat = x0.reshape(N, Cin, HW)
    y_flat = pl.pallas_call(
        _conv_bn_kernel,
        out_shape=jax.ShapeDtypeStruct((N, Cout, HW), jnp.float32),
        grid=(N,),
        in_specs=[
            pl.BlockSpec((None, Cin, HW), lambda n: (n, 0, 0)),
            pl.BlockSpec((Cout, Cin), lambda n: (0, 0)),
            pl.BlockSpec((Cout, 1), lambda n: (0, 0)),
        ],
        out_specs=pl.BlockSpec((None, Cout, HW), lambda n: (n, 0, 0)),
        compiler_params=pltpu.CompilerParams(
            dimension_semantics=("parallel",)),
    )(x_flat, w_folded, bias)

    # Free (metadata-only) HBM reshape: batch+channels fold into resize rows.
    NC = N * Cout
    y_maps = y_flat.reshape(NC, H, W)

    # Channel-map block per grid step: largest divisor of N*Cout <= 8 so there
    # are >=2 parallel grid steps (raise the cap / add spatial output tiling
    # for very large channel counts or feature maps).
    Bc = max(d for d in range(1, NC + 1) if NC % d == 0 and d <= 8)

    # ---- Stage 2: separable bilinear resize (W then H) -------------------
    out_maps = pl.pallas_call(
        _bilinear_resize_kernel,
        out_shape=jax.ShapeDtypeStruct((NC, Ho, Wo), jnp.float32),
        grid=(NC // Bc,),
        in_specs=[
            pl.BlockSpec((Bc, H, W), lambda i: (i, 0, 0)),
            pl.BlockSpec((W, Wo), lambda i: (0, 0)),
            pl.BlockSpec((Ho, H), lambda i: (0, 0)),
        ],
        out_specs=pl.BlockSpec((Bc, Ho, Wo), lambda i: (i, 0, 0)),
        compiler_params=pltpu.CompilerParams(
            dimension_semantics=("parallel",)),
    )(y_maps, A_wT, A_h)

    out = out_maps.reshape(N, Cout, Ho, Wo)
    return [out, x1, x2]


if __name__ == "__main__":
    N, Cin, Cout, H, W, SF = 2, 4, 8, 16, 16, 2
    key = jax.random.PRNGKey(0)
    k0, k1, k2, kw = jax.random.split(key, 4)

    x0 = jax.random.normal(k0, (N, Cin, H, W), dtype=jnp.float32)
    x1 = jax.random.normal(k1, (N, Cin, H // 2, W // 2), dtype=jnp.float32)
    x2 = jax.random.normal(k2, (N, Cin, H // 4, W // 4), dtype=jnp.float32)

    # Deterministic synthetic parameters (not loaded from a checkpoint).
    conv_w = 0.1 * jax.random.normal(kw, (Cout, Cin, 1, 1), dtype=jnp.float32)
    gamma = jnp.linspace(0.5, 1.5, Cout, dtype=jnp.float32)
    beta = jnp.linspace(-0.1, 0.1, Cout, dtype=jnp.float32)
    run_mean = jnp.linspace(-0.2, 0.2, Cout, dtype=jnp.float32)
    run_var = jnp.linspace(0.5, 1.5, Cout, dtype=jnp.float32)

    result = compression_forward([x0, x1, x2], conv_w, gamma, beta,
                                 run_mean, run_var, SF)
    out = jax.block_until_ready(result[0])

    # Pure-JAX reference: conv1x1 -> eval-mode BN -> bilinear resize built from
    # the same PyTorch-matching interpolation matrices.
    y_ref = jnp.einsum('oc,nchw->nohw', conv_w[:, :, 0, 0], x0)
    y_ref = (y_ref - run_mean[None, :, None, None]) / jnp.sqrt(
        run_var[None, :, None, None] + 1e-5)
    y_ref = y_ref * gamma[None, :, None, None] + beta[None, :, None, None]
    A_h_ref = jnp.asarray(_bilinear_matrix(H * SF, H))
    A_w_ref = jnp.asarray(_bilinear_matrix(W * SF, W))
    ref = jnp.einsum('oh,pw,nchw->ncop', A_h_ref, A_w_ref, y_ref)

    assert out.shape == (N, Cout, H * SF, W * SF)
    np.testing.assert_allclose(np.asarray(out), np.asarray(ref),
                               rtol=1e-4, atol=1e-4)
    print("KERNEL_OK")
</pallas_src>

<mosaic_0001>
module attributes {stable_mosaic.version = 11 : i64} {
  func.func @_conv_bn_kernel(%arg0: i32, %arg1: memref<1x4x256xf32, #tpu.memory_space<vmem>>, %arg2: memref<8x4xf32, #tpu.memory_space<vmem>>, %arg3: memref<8x1xf32, #tpu.memory_space<vmem>>, %arg4: memref<1x8x256xf32, #tpu.memory_space<vmem>>) attributes {dimension_semantics = [#tpu.dimension_semantics<parallel>], iteration_bounds = array<i64: 2>, scalar_prefetch = 0 : i64, scratch_operands = 0 : i64, tpu.core_type = #tpu.core_type<tc>, window_params = [{transform_indices = @transform_0, window_bounds = array<i64: 1, 4, 256>}, {pipeline_mode = #tpu.pipeline_mode<synchronous>, transform_indices = @transform_1, window_bounds = array<i64: 8, 4>}, {pipeline_mode = #tpu.pipeline_mode<synchronous>, transform_indices = @transform_2, window_bounds = array<i64: 8, 1>}, {transform_indices = @transform_3, window_bounds = array<i64: 1, 8, 256>}]} {
    %c0 = arith.constant 0 : index
    %c0_0 = arith.constant 0 : index
    %0 = vector.load %arg2[%c0, %c0_0] : memref<8x4xf32, #tpu.memory_space<vmem>>, vector<8x4xf32>
    %c0_1 = arith.constant 0 : index
    %c0_2 = arith.constant 0 : index
    %c0_3 = arith.constant 0 : index
    %1 = vector.load %arg1[%c0_1, %c0_2, %c0_3] : memref<1x4x256xf32, #tpu.memory_space<vmem>>, vector<1x4x256xf32>
    %2 = vector.shape_cast %1 : vector<1x4x256xf32> to vector<4x256xf32>
    %cst = arith.constant dense<0.000000e+00> : vector<8x256xf32>
    %3 = tpu.matmul %0, %2, %cst {dimension_numbers = #tpu.dot_dimension_numbers<[1], [0], [0], [1], [0, 0, 1, 1], [], []>} : vector<8x4xf32>, vector<4x256xf32>, vector<8x256xf32> -> vector<8x256xf32>
    %c0_4 = arith.constant 0 : index
    %c0_5 = arith.constant 0 : index
    %4 = vector.load %arg3[%c0_4, %c0_5] : memref<8x1xf32, #tpu.memory_space<vmem>>, vector<8x1xf32>
    %5 = vector.broadcast %4 : vector<8x1xf32> to vector<8x256xf32>
    %6 = arith.addf %3, %5 : vector<8x256xf32>
    %c0_6 = arith.constant 0 : index
    %c0_7 = arith.constant 0 : index
    %c0_8 = arith.constant 0 : index
    %7 = vector.load %arg4[%c0_6, %c0_7, %c0_8] : memref<1x8x256xf32, #tpu.memory_space<vmem>>, vector<1x8x256xf32>
    %8 = vector.shape_cast %7 : vector<1x8x256xf32> to vector<8x256xf32>
    %9 = vector.shape_cast %6 : vector<8x256xf32> to vector<1x8x256xf32>
    tpu.vector_store %arg4[%c0_6, %c0_7, %c0_8], %9 {strides = array<i32>} : memref<1x8x256xf32, #tpu.memory_space<vmem>>, vector<1x8x256xf32>,
    return
  }
  func.func @transform_0(%arg0: i32) -> (i32, i32, i32) {
    %c0_i32 = arith.constant 0 : i32
    %c0_i32_0 = arith.constant 0 : i32
    %c0_i32_1 = arith.constant 0 : i32
    return %arg0, %c0_i32, %c0_i32_0 : i32, i32, i32
  }
  func.func @transform_1(%arg0: i32) -> (i32, i32) {
    %c0_i32 = arith.constant 0 : i32
    %c0_i32_0 = arith.constant 0 : i32
    %c0_i32_1 = arith.constant 0 : i32
    return %c0_i32, %c0_i32_0 : i32, i32
  }
  func.func @transform_2(%arg0: i32) -> (i32, i32) {
    %c0_i32 = arith.constant 0 : i32
    %c0_i32_0 = arith.constant 0 : i32
    %c0_i32_1 = arith.constant 0 : i32
    return %c0_i32, %c0_i32_0 : i32, i32
  }
  func.func @transform_3(%arg0: i32) -> (i32, i32, i32) {
    %c0_i32 = arith.constant 0 : i32
    %c0_i32_0 = arith.constant 0 : i32
    %c0_i32_1 = arith.constant 0 : i32
    return %arg0, %c0_i32, %c0_i32_0 : i32, i32, i32
  }
}

</mosaic_0001>

<llo_original>
// kernel: tpu_custom_call.1
$region0: #{tpu_custom_call.1}
  #allocation0 [shape = 'u32[]', space=smem, size = 0x4, offset = 0x4, fixed_abs, tag = 'smem constant byte address 0x4 - core index']
  #allocation1 [shape = 'u32[144,128]{1,0:T(1,128)}', space=vmem, size = 0x12000, scoped, tag = 'internal scratch']
  %s0 = inlined_call_operand.vmem [shape: f32[2,4,256], index: 0, kind: input, shape index: {}]
  %s1 = inlined_call_operand.vmem [shape: f32[8,4], index: 1, kind: input, shape index: {}]
  %s2 = inlined_call_operand.vmem [shape: f32[8,1], index: 2, kind: input, shape index: {}]
  %s3 = inlined_call_operand.hbm [shape: f32[2,8,256], index: 3, kind: output, shape index: {}]
  %s4 = sld [smem:[#allocation0]]
  $region45: #{tpu_custom_call.1} parent=0
    _
  %s6 = ssub.s32 1, %s4
  %s7 = scalar_select 0, %s6, %s4
  $region1: #{tpu_custom_call.1} parent=0
    #allocation2 [shape = 'u8[16384]{0}', space=vmem, size = 0x4000, scoped, tag = 'output window, operand 0']
    #allocation3 [shape = 's32[2]{0}', space=sflag, size = 0x8, scoped, tag = 'scoped memory for tpu_custom_call.1']
    %8 = vsyncpa [#allocation3], 0
    %s9 = scalar_lea.sflag [#allocation3], 1
    %10 = vsyncpa %s9, 0
    loop: start=0, step=1, limit=4
    $region2: #{tpu_custom_call.1} parent=1 // loop_pre_header
      _
    $region3: #{tpu_custom_call.1} parent=1 // loop_header
      %s12 = sphi 0, %s16
      %p13 = scmp.ge.s32.totalorder %s12, 4
      %s22 = sphi 0, %s24
      %s25 = sphi 0, %s22
      %s26 = sphi 0, %s25
      %s42 = sphi 0, %s26
      %s46 = sphi 0, %s46
      %s48 = sphi 0, %s46
      %s49 = sphi 0, %s48
      %s63 = sphi 0, %s49
      %s67 = sphi 0, %s67
      %s69 = sphi 0, %s67
      %s70 = sphi 0, %s69
      %s84 = sphi 0, %s70
      %s90 = sphi 0, %s92
      %s93 = sphi 0, %s90
      %s94 = sphi 0, %s93
      %s110 = sphi 0, %s94
    $region4: #{tpu_custom_call.1} parent=1 // loop_header_branch
      %15 = sbr.rel (%p13) target = $region8
    $region5: #{tpu_custom_call.1} parent=1 // loop_body
      %s17 = ssub.s32 %s12, 1
      %s18 = ssub.s32 %s12, 2
      %s19 = sadd.s32 %s12, 1
      %s20 = ssub.s32 %s12, %s19
      %p21 = scmp.eq.s32.totalorder %s20, 0
      %s23 = sadd.s32 %s22, 1
      %s24 = scalar_select %p21, %s22, %s23
      %p27 = pneg %p21
      %p28 = scmp.eq.s32.totalorder %s12, 1
      %p29 = por %p27, %p28
      %p30 = scmp.ne.s32.totalorder %s22, %s25
      %p31 = scmp.eq.s32.totalorder %s12, 0
      %p32 = por %p30, %p31
      %p33 = scmp.ne.s32.totalorder %s22, %s25
      %p34 = scmp.eq.s32.totalorder %s17, 1
      %p35 = por %p33, %p34
      %p36 = scmp.ne.s32.totalorder %s25, %s26
      %p37 = scmp.eq.s32.totalorder %s17, 0
      %p38 = por %p36, %p37
      %p39 = scmp.ne.s32.totalorder %s25, %s26
      %p40 = scmp.eq.s32.totalorder %s18, 1
      %p41 = por %p39, %p40
      %p43 = scmp.ne.s32.totalorder %s26, %s42
      %p44 = scmp.eq.s32.totalorder %s18, 0
      %p45 = por %p43, %p44
      %s47 = sadd.s32 %s46, 1
      %p50 = scmp.eq.s32.totalorder %s12, 1
      %p51 = scmp.ne.s32.totalorder %s46, %s48
      %p52 = scmp.eq.s32.totalorder %s12, 0
      %p53 = por %p51, %p52
      %p54 = scmp.ne.s32.totalorder %s46, %s48
      %p55 = scmp.eq.s32.totalorder %s17, 1
      %p56 = por %p54, %p55
      %p57 = scmp.ne.s32.totalorder %s48, %s49
      %p58 = scmp.eq.s32.totalorder %s17, 0
      %p59 = por %p57, %p58
      %p60 = scmp.ne.s32.totalorder %s48, %s49
      %p61 = scmp.eq.s32.totalorder %s18, 1
      %p62 = por %p60, %p61
      %p64 = scmp.ne.s32.totalorder %s49, %s63
      %p65 = scmp.eq.s32.totalorder %s18, 0
      %p66 = por %p64, %p65
      %s68 = sadd.s32 %s67, 1
      %p71 = scmp.eq.s32.totalorder %s12, 1
      %p72 = scmp.ne.s32.totalorder %s67, %s69
      %p73 = scmp.eq.s32.totalorder %s12, 0
      %p74 = por %p72, %p73
      %p75 = scmp.ne.s32.totalorder %s67, %s69
      %p76 = scmp.eq.s32.totalorder %s17, 1
      %p77 = por %p75, %p76
      %p78 = scmp.ne.s32.totalorder %s69, %s70
      %p79 = scmp.eq.s32.totalorder %s17, 0
      %p80 = por %p78, %p79
      %p81 = scmp.ne.s32.totalorder %s69, %s70
      %p82 = scmp.eq.s32.totalorder %s18, 1
      %p83 = por %p81, %p82
      %p85 = scmp.ne.s32.totalorder %s70, %s84
      %p86 = scmp.eq.s32.totalorder %s18, 0
      %p87 = por %p85, %p86
      %s88 = ssub.s32 %s12, %s19
      %p89 = scmp.eq.s32.totalorder %s88, 0
      %s91 = sadd.s32 %s90, 1
      %s92 = scalar_select %p89, %s90, %s91
      %p95 = pneg %p89
      %p96 = scmp.eq.s32.totalorder %s12, 1
      %p97 = por %p95, %p96
      %p98 = scmp.ne.s32.totalorder %s90, %s93
      %p99 = scmp.eq.s32.totalorder %s12, 0
      %p100 = por %p98, %p99
      %p101 = scmp.ne.s32.totalorder %s90, %s93
      %p102 = scmp.eq.s32.totalorder %s17, 1
      %p103 = por %p101, %p102
      %p104 = scmp.ne.s32.totalorder %s93, %s94
      %p105 = scmp.eq.s32.totalorder %s17, 0
      %p106 = por %p104, %p105
      %p107 = scmp.ne.s32.totalorder %s93, %s94
      %p108 = scmp.eq.s32.totalorder %s18, 1
      %p109 = por %p107, %p108
      %p111 = scmp.ne.s32.totalorder %s94, %s110
      %p112 = scmp.eq.s32.totalorder %s18, 0
      %p113 = por %p111, %p112
      %p114 = scmp.le.s32.totalorder 1, %s12
      %p115 = scmp.lt.s32.totalorder %s12, 3
      %p116 = pnand %p114, %p115
      %p117 = pneg %p116
      // Predicated region
      $region9: #{tpu_custom_call.1} parent=5 // pred_check
        _
      $region10: #{tpu_custom_call.1} parent=5 // pred_check_branch
        %119 = sbr.rel (%p116) target = $region12
      $region11: #{tpu_custom_call.1} parent=5 // pred_region
        %s120 = ssub.s32 %s12, 1
        // Predicated region
        $region13: #{tpu_custom_call.1} parent=11 // pred_check
          %p121 = pneg %p59
        $region14: #{tpu_custom_call.1} parent=11 // pred_check_branch
          %123 = sbr.rel (%p121) target = $region16
        $region15: #{tpu_custom_call.1} parent=11 // pred_region
          _
        $region16: #{tpu_custom_call.1} parent=11 // pred_fallthru
          _
        // Predicated region
        $region17: #{tpu_custom_call.1} parent=11 // pred_check
          %p124 = pneg %p80
        $region18: #{tpu_custom_call.1} parent=11 // pred_check_branch
          %126 = sbr.rel (%p124) target = $region20
        $region19: #{tpu_custom_call.1} parent=11 // pred_region
          _
        $region20: #{tpu_custom_call.1} parent=11 // pred_fallthru
          _
      $region12: #{tpu_custom_call.1} parent=5 // pred_fallthru
        _
      %p127 = scmp.lt.s32.totalorder %s12, 2
      // Predicated region
      $region21: #{tpu_custom_call.1} parent=5 // pred_check
        %p128 = pneg %p127
      $region22: #{tpu_custom_call.1} parent=5 // pred_check_branch
        %130 = sbr.rel (%p128) target = $region24
      $region23: #{tpu_custom_call.1} parent=5 // pred_region
        // Predicated region
        $region25: #{tpu_custom_call.1} parent=23 // pred_check
          %p131 = pneg %p32
        $region26: #{tpu_custom_call.1} parent=23 // pred_check_branch
          %133 = sbr.rel (%p131) target = $region28
        $region27: #{tpu_custom_call.1} parent=23 // pred_region
          %p134 = scmp.lt.s32.totalorder %s12, 1
          %s135 = scalar_select %p134, %s12, 1
          %s136 = smul.addr %s135, 2
          %s137 = smul.addr %s136, 4
          %s138 = scalar_lea.vmem %s0, %s137
        $region28: #{tpu_custom_call.1} parent=23 // pred_fallthru
          _
      $region24: #{tpu_custom_call.1} parent=5 // pred_fallthru
        _
      %p139 = scmp.le.s32.totalorder 1, %s12
      %p140 = scmp.lt.s32.totalorder %s12, 3
      %p141 = pnand %p139, %p140
      %p142 = pneg %p141
      // Predicated region
      $region29: #{tpu_custom_call.1} parent=5 // pred_check
        _
      $region30: #{tpu_custom_call.1} parent=5 // pred_check_branch
        %144 = sbr.rel (%p141) target = $region32
      $region31: #{tpu_custom_call.1} parent=5 // pred_region
        %s145 = ssub.s32 %s12, 1
        %p146 = scmp.lt.s32.totalorder %s17, 1
        %s147 = scalar_select %p146, %s17, 1
        %s148 = smul.addr %s147, 2
        %s149 = smul.addr %s148, 4
        %s150 = scalar_lea.vmem %s0, %s149
        %p151 = pneg %p38
        %p152 = pneg %p35
        %p153 = pneg %p59
        %p154 = pneg %p56
        %p155 = pneg %p80
        %p156 = pneg %p77
        %p157 = pneg %p106
        %p158 = pneg %p103
        %s159 = sand.u32 %s93, 1
        %s160 = scalar_lea.sflag [#allocation3], %s159
        %s161 = sand.u32 %s93, 1
        %s162 = smul.addr %s161, 16
        %s163 = scalar_lea.vmem [#allocation2], %s162
        %p164 = scmp.lt.s32.totalorder %s17, 1
        %s165 = scalar_select %p164, %s17, 1
        %s166 = smul.addr %s165, 2
        %s167 = smul.addr %s166, 4
        %s168 = scalar_lea.vmem %s0, %s167
        %v169 = vld [vmem:[%s1] sm:$0xff]
        %v170 = vld [vmem:[%s168] sm:$0xff]
        %v171 = vld [vmem:[%s2] sm:$0xff]
        %173 = vset.pattern.permute.xlu0 0
        %174 = vperm.xlu0 %173, %v171
        %v175 = vpop.permute.xlu0 %174
        %v178 = vcombine.high %v170, %v170
        %vm179 = vcmask 31744
        %v181 = vsel %vm179, %v169, 0
        %vm183 = vcmask 1043456
        %v184 = vsel %vm183, %v170, 0
        %v186 = vsel %vm183, %v178, 0
        %188 = vmatprep.subr.mxu0 0.0
        %189 = vmatpush1.msra.mxu0 0.0
        %190 = vmatprep.subr.mxu0 0.0
        %191 = vmatpush1.msra.mxu0 0.0
        %192 = vmatprep.subr.mxu0 0.0
        %193 = vmatpush1.msra.mxu0 0.0
        %194 = vmatprep.subr.mxu0 0.0
        %195 = vmatpush1.msra.mxu0 0.0
        %196 = vmatprep.subr.mxu0 0.0
        %197 = vmatpush1.msra.mxu0 0.0
        %198 = vmatprep.subr.mxu0 0.0
        %199 = vmatpush1.msra.mxu0 0.0
        %200 = vmatprep.subr.mxu0 0.0
        %201 = vmatpush1.msra.mxu0 0.0
        %202 = vmatprep.subr.mxu0 0.0
        %203 = vmatpush1.msra.mxu0 0.0
        %204 = vmatprep.subr.mxu0 0.0
        %205 = vmatpush1.msra.mxu0 0.0
        %206 = vmatprep.subr.mxu0 0.0
        %207 = vmatpush1.msra.mxu0 0.0
        %208 = vmatprep.subr.mxu0 0.0
        %209 = vmatpush1.msra.mxu0 0.0
        %210 = vmatprep.subr.mxu0 0.0
        %211 = vmatpush1.msra.mxu0 0.0
        %212 = vmatprep.subr.mxu0 0.0
        %213 = vmatpush1.msra.mxu0 0.0
        %214 = vmatprep.subr.mxu0 0.0
        %215 = vmatpush1.msra.mxu0 0.0
        %216 = vmatprep.subr.mxu0 0.0
        %217 = vmatpush1.msra.mxu0 0.0
        %218 = vmatprep.subr.mxu0 %v186
        %219 = vmatpush1.msra.mxu0 %v184
        %220 = vmatprep.subr.mxu0 0.0
        %221 = vmatpush2.msra.mxu0 0.0
        %222 = vmatprep.subr.mxu0 0.0
        %223 = vmatpush2.msra.mxu0 0.0
        %224 = vmatprep.subr.mxu0 0.0
        %225 = vmatpush2.msra.mxu0 0.0
        %226 = vmatprep.subr.mxu0 0.0
        %227 = vmatpush2.msra.mxu0 0.0
        %228 = vmatprep.subr.mxu0 0.0
        %229 = vmatpush2.msra.mxu0 0.0
        %230 = vmatprep.subr.mxu0 0.0
        %231 = vmatpush2.msra.mxu0 0.0
        %232 = vmatprep.subr.mxu0 0.0
        %233 = vmatpush2.msra.mxu0 0.0
        %234 = vmatprep.subr.mxu0 0.0
        %235 = vmatpush2.msra.mxu0 0.0
        %236 = vmatprep.subr.mxu0 0.0
        %237 = vmatpush2.msra.mxu0 0.0
        %238 = vmatprep.subr.mxu0 0.0
        %239 = vmatpush2.msra.mxu0 0.0
        %240 = vmatprep.subr.mxu0 0.0
        %241 = vmatpush2.msra.mxu0 0.0
        %242 = vmatprep.subr.mxu0 0.0
        %243 = vmatpush2.msra.mxu0 0.0
        %244 = vmatprep.subr.mxu0 0.0
        %245 = vmatpush2.msra.mxu0 0.0
        %246 = vmatprep.subr.mxu0 0.0
        %247 = vmatpush2.msra.mxu0 0.0
        %248 = vmatprep.subr.mxu0 0.0
        %249 = vmatpush2.msra.mxu0 0.0
        %250 = vmatprep.subr.mxu0 0.0
        %251 = vmatpush2.msra.mxu0 0.0
        %252 = vmatprep.mubr.f32.mxu0 0.0
        %253 = vmatmul.mubr.f32.gmra.mxu0 %v181
        %v254 = vpop.f32.mrf.mxu0
        %v255 = vadd.f32 %v175, %v254
        %v256 = vpop.f32.mrf.mxu0
        %v257 = vadd.f32 %v175, %v256
        %258 = vdwg.mxu0
        %259 = vst [vmem:[%s163] sm:$0xff] %v255
        %260 = vst [vmem:[%s163 + $0x8] sm:$0xff] %v257
        %s261 = sand.u32 %s93, 1
        %s262 = scalar_lea.sflag [#allocation3], %s261
        %s263 = sand.u32 %s93, 1
        %s264 = smul.addr %s263, 16
        %s265 = scalar_lea.vmem [#allocation2], %s264
        // Predicated region
        $region33: #{tpu_custom_call.1} parent=31 // pred_check
          %p266 = pneg %p103
        $region34: #{tpu_custom_call.1} parent=31 // pred_check_branch
          %268 = sbr.rel (%p266) target = $region36
        $region35: #{tpu_custom_call.1} parent=31 // pred_region
          %s270 = ssub.s32 256, 256
          %271 = vsyncadd %s262, %s270
          %s272 = smul.addr %s17, 2
          %s273 = smul.addr %s272, 128
          %s274 = scalar_lea.hbm %s3, %s273
          %s276 = sshll.u32 %s265, 4
          %s277 = int_to_ptr.vmem [resolvable:$true] %s276
          %279 = dma.vmem_to_hbm [thread:$0]  %s277, 256, %s274, %s262
        $region36: #{tpu_custom_call.1} parent=31 // pred_fallthru
          _
      $region32: #{tpu_custom_call.1} parent=5 // pred_fallthru
        _
      %p280 = scmp.le.s32.totalorder 2, %s12
      // Predicated region
      $region37: #{tpu_custom_call.1} parent=5 // pred_check
        %p281 = pneg %p280
      $region38: #{tpu_custom_call.1} parent=5 // pred_check_branch
        %283 = sbr.rel (%p281) target = $region40
      $region39: #{tpu_custom_call.1} parent=5 // pred_region
        %s284 = ssub.s32 %s12, 2
        // Predicated region
        $region41: #{tpu_custom_call.1} parent=39 // pred_check
          %p285 = pneg %p109
        $region42: #{tpu_custom_call.1} parent=39 // pred_check_branch
          %287 = sbr.rel (%p285) target = $region44
        $region43: #{tpu_custom_call.1} parent=39 // pred_region
          %s288 = sand.u32 %s94, 1
          %s289 = scalar_lea.sflag [#allocation3], %s288
          %s290 = sand.u32 %s94, 1
          %s291 = smul.addr %s290, 16
          %s292 = scalar_lea.vmem [#allocation2], %s291
          %293 = dma.done %s289, 256
        $region44: #{tpu_custom_call.1} parent=39 // pred_fallthru
          _
      $region40: #{tpu_custom_call.1} parent=5 // pred_fallthru
        _
    $region6: #{tpu_custom_call.1} parent=1 // loop_footer
      %s16 = sadd.s32 1, %s12
    $region7: #{tpu_custom_call.1} parent=1 // loop_footer_branch
      %11 = sbr.rel target = $region3
    $region8: #{tpu_custom_call.1} parent=1 // loop_exit
      _
    %294 = vsyncpa [#allocation3], 1
    %s295 = scalar_lea.sflag [#allocation3], 1
    %296 = vsyncpa %s295, 1

</llo_original>
